<compile_context>
chip_gen: v6e
topology: v6e:2x2x1
jax: 0.10.0
libtpu: 0.0.40
codegen_flags: <defaults>
</compile_context>

<pallas_src>
import functools

import jax
import jax.numpy as jnp
from jax import lax
from jax.experimental import pallas as pl
from jax.experimental.pallas import tpu as pltpu


def _largest_divisor_tile(n, max_tile, quantum):
    """Largest t <= max_tile with n % t == 0 and (t % quantum == 0 or t == n).

    Returns 0 if no such tile exists (caller clamps + masks instead).
    """
    if n <= max_tile:
        return n
    best = 0
    t = quantum
    while t <= max_tile:
        if n % t == 0:
            best = t
        t += quantum
    return best


def _fused_loss_kernel(feat_ref, w_ref, scores_ref, bias_ref, out_ref, acc_ref,
                       *, seq_len, s_tile, needs_mask):
    """Streaming mean-pool over S fused with the Linear/Tanh/Softmax/loss tail."""
    s = pl.program_id(1)

    @pl.when(s == 0)
    def _():
        acc_ref[...] = jnp.zeros_like(acc_ref)

    # Native-dtype tile in VMEM; cast to f32 only for the accumulation.
    x = feat_ref[...].astype(jnp.float32)                       # (b_tile, s_tile, D)
    if needs_mask:
        # Last S block may extend past seq_len: zero out the padded tail rows.
        row = s * s_tile + lax.broadcasted_iota(jnp.int32, (s_tile, 1), 0)
        x = jnp.where(row < seq_len, x, 0.0)
    acc_ref[...] += jnp.sum(x, axis=1)                          # (b_tile, D)

    @pl.when(s == pl.num_programs(1) - 1)
    def _():
        pooled = acc_ref[...] * (1.0 / float(seq_len))          # (b_tile, D) f32
        w = w_ref[...]                                          # (1, D) f32
        b = bias_ref[0, 0]                                      # scalar (SMEM)

        logits = jnp.sum(pooled * w, axis=-1, keepdims=True) + b   # (b_tile, 1)
        t = jnp.tanh(logits)
        # softmax over dim=1 (size 1): mathematically all-ones, computed faithfully.
        m = jnp.max(t, axis=1, keepdims=True)
        e = jnp.exp(t - m)
        attn = e / jnp.sum(e, axis=1, keepdims=True)            # (b_tile, 1)

        preds = jnp.sum(pooled * attn, axis=1, keepdims=True)   # (b_tile, 1)
        diff = preds - scores_ref[0]                            # (b_tile, 1)
        partial = jnp.sum(jnp.abs(diff * diff))                 # scalar sq-err sum
        out_ref[...] = jnp.broadcast_to(partial, out_ref.shape)  # lane-dense store


def regression_loss_attention(features, scores, w, bias):
    """features: (B, S, D); scores: (B,); w: (1, D); bias: (1,). Returns scalar loss."""
    B, S, D = features.shape
    dtype_bytes = jnp.dtype(features.dtype).itemsize
    # Sublane packing quantum: 8 for f32, 16 for bf16, 32 for int8/fp8.
    quantum = max(8, 32 // dtype_bytes)

    # ---- batch tiling: >= 2 batch tiles whenever B >= 2 (use both v7x TCs) ----
    b_cap = min(8, max(1, B // 2)) if B >= 2 else 1
    b_tile = max(d for d in range(1, b_cap + 1) if B % d == 0)
    num_b_tiles = B // b_tile

    # ---- sequence tiling: ~8 MiB per (double-buffered) input buffer ----
    budget = 8 * 1024 * 1024
    max_rows = max(quantum, budget // max(1, b_tile * D * dtype_bytes))
    s_tile = _largest_divisor_tile(S, min(S, max_rows), quantum)
    if s_tile == 0:
        # No aligned divisor fits the budget: clamp and mask the ragged tail.
        s_tile = min(S, max(quantum, (max_rows // quantum) * quantum))
    needs_mask = (S % s_tile) != 0
    num_s_tiles = pl.cdiv(S, s_tile)
    grid = (num_b_tiles, num_s_tiles)

    cost = pl.CostEstimate(
        flops=int(B * S * D + 4 * B * D),
        transcendentals=int(2 * B),
        bytes_accessed=int(B * S * D * dtype_bytes
                           + (D + B + num_b_tiles * 128) * 4),
    )

    scores3d = scores.reshape(num_b_tiles, b_tile, 1).astype(jnp.float32)
    bias2d = bias.reshape(1, 1).astype(jnp.float32)
    w2d = w.reshape(1, D).astype(jnp.float32)

    kernel = functools.partial(_fused_loss_kernel, seq_len=S, s_tile=s_tile,
                               needs_mask=needs_mask)

    partials = pl.pallas_call(
        kernel,
        out_shape=jax.ShapeDtypeStruct((num_b_tiles, 1, 128), jnp.float32),
        grid=grid,
        in_specs=[
            pl.BlockSpec((b_tile, s_tile, D), lambda b, s: (b, s, 0)),   # features
            pl.BlockSpec((1, D), lambda b, s: (0, 0)),                   # linear weight
            pl.BlockSpec((1, b_tile, 1), lambda b, s: (b, 0, 0)),        # scores
            pl.BlockSpec(memory_space=pltpu.MemorySpace.SMEM),           # bias scalar
        ],
        out_specs=pl.BlockSpec((1, 1, 128), lambda b, s: (b, 0, 0)),
        scratch_shapes=[pltpu.VMEM((b_tile, D), jnp.float32)],
        compiler_params=pltpu.CompilerParams(
            dimension_semantics=("parallel", "arbitrary"),
            vmem_limit_bytes=32 * 1024 * 1024),
        cost_estimate=cost,
    )(features, w2d, scores3d, bias2d)

    # Tiny JAX tail: mean over B from per-batch-tile partial squared-error sums.
    return jnp.sum(partials[:, 0, 0]) / B


if __name__ == "__main__":
    key = jax.random.PRNGKey(0)
    k1, k2, k3, k4 = jax.random.split(key, 4)

    # Small shapes consistent with the module (input_size scaled down from 1280).
    B, S, D = 2, 8, 128
    features = jax.random.normal(k1, (B, S, D), dtype=jnp.float32)
    scores = jax.random.normal(k2, (B,), dtype=jnp.float32)

    # Deterministic init of nn.Linear(input_size, 1) parameters.
    w = jax.random.normal(k3, (1, D), dtype=jnp.float32) * (1.0 / jnp.sqrt(D))
    bias = jax.random.normal(k4, (1,), dtype=jnp.float32) * 0.01

    loss = jax.block_until_ready(
        jax.jit(regression_loss_attention)(features, scores, w, bias))

    # Pure-JAX reference for correctness.
    pooled = jnp.mean(features.astype(jnp.float32), axis=1)
    logits = pooled @ w.T + bias
    attn = jax.nn.softmax(jnp.tanh(logits), axis=1)
    preds = jnp.sum(pooled * attn, axis=1)
    ref = jnp.mean(jnp.abs((preds - scores) ** 2))

    assert jnp.allclose(loss, ref, atol=1e-5, rtol=1e-5), (loss, ref)
    print("KERNEL_OK")
</pallas_src>

<mosaic_0001>
module attributes {stable_mosaic.version = 11 : i64} {
  func.func @_fused_loss_kernel(%arg0: i32, %arg1: i32, %arg2: memref<1x8x128xf32, #tpu.memory_space<vmem>>, %arg3: memref<1x128xf32, #tpu.memory_space<vmem>>, %arg4: memref<1x1x1xf32, #tpu.memory_space<vmem>>, %arg5: memref<1x1xf32, #tpu.memory_space<smem>>, %arg6: memref<1x1x128xf32, #tpu.memory_space<vmem>>, %arg7: memref<1x128xf32, #tpu.memory_space<vmem>>) attributes {dimension_semantics = [#tpu.dimension_semantics<parallel>, #tpu.dimension_semantics<arbitrary>], iteration_bounds = array<i64: 2, 1>, scalar_prefetch = 0 : i64, scratch_operands = 1 : i64, tpu.core_type = #tpu.core_type<tc>, window_params = [{transform_indices = @transform_0, window_bounds = array<i64: 1, 8, 128>}, {pipeline_mode = #tpu.pipeline_mode<synchronous>, transform_indices = @transform_1, window_bounds = array<i64: 1, 128>}, {transform_indices = @transform_2, window_bounds = array<i64: 1, 1, 1>}, {transform_indices = @transform_3, window_bounds = array<i64: 1, 1>}, {transform_indices = @transform_4, window_bounds = array<i64: 1, 1, 128>}]} {
    %c0_i32 = arith.constant 0 : i32
    %0 = arith.cmpi eq, %arg1, %c0_i32 : i32
    %1 = arith.extui %0 : i1 to i32
    %c0_i32_0 = arith.constant 0 : i32
    %2 = arith.cmpi ne, %1, %c0_i32_0 : i32
    scf.if %2 {
      %cst_9 = arith.constant 0.000000e+00 : f32
      %11 = vector.broadcast %cst_9 : f32 to vector<1x128xf32>
      %c0_10 = arith.constant 0 : index
      %c0_11 = arith.constant 0 : index
      %12 = vector.load %arg7[%c0_10, %c0_11] : memref<1x128xf32, #tpu.memory_space<vmem>>, vector<1x128xf32>
      tpu.vector_store %arg7[%c0_10, %c0_11], %11 {strides = array<i32>} : memref<1x128xf32, #tpu.memory_space<vmem>>, vector<1x128xf32>,
    } else {
    }
    %c0 = arith.constant 0 : index
    %c0_1 = arith.constant 0 : index
    %c0_2 = arith.constant 0 : index
    %3 = vector.load %arg2[%c0, %c0_1, %c0_2] : memref<1x8x128xf32, #tpu.memory_space<vmem>>, vector<1x8x128xf32>
    %c0_3 = arith.constant 0 : index
    %c0_4 = arith.constant 0 : index
    %4 = vector.load %arg7[%c0_3, %c0_4] : memref<1x128xf32, #tpu.memory_space<vmem>>, vector<1x128xf32>
    %cst = arith.constant dense<0.000000e+00> : vector<1x128xf32>
    %5 = vector.multi_reduction <add>, %3, %cst [1] : vector<1x8x128xf32> to vector<1x128xf32>
    %6 = arith.addf %4, %5 : vector<1x128xf32>
    %c0_5 = arith.constant 0 : index
    %c0_6 = arith.constant 0 : index
    %7 = vector.load %arg7[%c0_5, %c0_6] : memref<1x128xf32, #tpu.memory_space<vmem>>, vector<1x128xf32>
    tpu.vector_store %arg7[%c0_5, %c0_6], %6 {strides = array<i32>} : memref<1x128xf32, #tpu.memory_space<vmem>>, vector<1x128xf32>,
    %c0_i32_7 = arith.constant 0 : i32
    %8 = arith.cmpi eq, %arg1, %c0_i32_7 : i32
    %9 = arith.extui %8 : i1 to i32
    %c0_i32_8 = arith.constant 0 : i32
    %10 = arith.cmpi ne, %9, %c0_i32_8 : i32
    scf.if %10 {
      %c0_9 = arith.constant 0 : index
      %c0_10 = arith.constant 0 : index
      %11 = vector.load %arg7[%c0_9, %c0_10] : memref<1x128xf32, #tpu.memory_space<vmem>>, vector<1x128xf32>
      %cst_11 = arith.constant 1.250000e-01 : f32
      %12 = vector.broadcast %cst_11 : f32 to vector<1x128xf32>
      %13 = arith.mulf %11, %12 : vector<1x128xf32>
      %c0_12 = arith.constant 0 : index
      %c0_13 = arith.constant 0 : index
      %14 = vector.load %arg3[%c0_12, %c0_13] : memref<1x128xf32, #tpu.memory_space<vmem>>, vector<1x128xf32>
      %c0_14 = arith.constant 0 : index
      %c0_15 = arith.constant 0 : index
      %15 = memref.load %arg5[%c0_14, %c0_15] : memref<1x1xf32, #tpu.memory_space<smem>>
      %16 = arith.mulf %13, %14 : vector<1x128xf32>
      %cst_16 = arith.constant dense<0.000000e+00> : vector<1xf32>
      %17 = vector.multi_reduction <add>, %16, %cst_16 [1] : vector<1x128xf32> to vector<1xf32>
      %18 = vector.shape_cast %17 : vector<1xf32> to vector<1x1xf32>
      %19 = vector.broadcast %15 : f32 to vector<1x1xf32>
      %20 = arith.addf %18, %19 : vector<1x1xf32>
      %21 = math.tanh %20 : vector<1x1xf32>
      %cst_17 = arith.constant dense<0xFF800000> : vector<1xf32>
      %22 = vector.multi_reduction <maximumf>, %21, %cst_17 [1] : vector<1x1xf32> to vector<1xf32>
      %23 = vector.shape_cast %22 : vector<1xf32> to vector<1x1xf32>
      %24 = arith.subf %21, %23 : vector<1x1xf32>
      %25 = math.exp %24 : vector<1x1xf32>
      %cst_18 = arith.constant dense<0.000000e+00> : vector<1xf32>
      %26 = vector.multi_reduction <add>, %25, %cst_18 [1] : vector<1x1xf32> to vector<1xf32>
      %27 = vector.shape_cast %26 : vector<1xf32> to vector<1x1xf32>
      %28 = arith.divf %25, %27 : vector<1x1xf32>
      %29 = vector.broadcast %28 : vector<1x1xf32> to vector<1x128xf32>
      %30 = arith.mulf %13, %29 : vector<1x128xf32>
      %cst_19 = arith.constant dense<0.000000e+00> : vector<1xf32>
      %31 = vector.multi_reduction <add>, %30, %cst_19 [1] : vector<1x128xf32> to vector<1xf32>
      %32 = vector.shape_cast %31 : vector<1xf32> to vector<1x1xf32>
      %c0_20 = arith.constant 0 : index
      %c0_21 = arith.constant 0 : index
      %c0_22 = arith.constant 0 : index
      %33 = vector.load %arg4[%c0_20, %c0_21, %c0_22] : memref<1x1x1xf32, #tpu.memory_space<vmem>>, vector<1x1x1xf32>
      %34 = vector.shape_cast %33 : vector<1x1x1xf32> to vector<1x1xf32>
      %35 = arith.subf %32, %34 : vector<1x1xf32>
      %36 = arith.mulf %35, %35 : vector<1x1xf32>
      %37 = math.absf %36 : vector<1x1xf32>
      %38 = vector.shape_cast %37 : vector<1x1xf32> to vector<1x1x1xf32>
      %cst_23 = arith.constant dense<0.000000e+00> : vector<1xf32>
      %39 = vector.multi_reduction <add>, %38, %cst_23 [1, 2] : vector<1x1x1xf32> to vector<1xf32>
      %40 = vector.shape_cast %39 : vector<1xf32> to vector<1x1x1xf32>
      %41 = vector.extract %40[0, 0, 0] : f32 from vector<1x1x1xf32>
      %42 = vector.broadcast %41 : f32 to vector<1x1x128xf32>
      %c0_24 = arith.constant 0 : index
      %c0_25 = arith.constant 0 : index
      %c0_26 = arith.constant 0 : index
      %43 = vector.load %arg6[%c0_24, %c0_25, %c0_26] : memref<1x1x128xf32, #tpu.memory_space<vmem>>, vector<1x1x128xf32>
      tpu.vector_store %arg6[%c0_24, %c0_25, %c0_26], %42 {strides = array<i32>} : memref<1x1x128xf32, #tpu.memory_space<vmem>>, vector<1x1x128xf32>,
    } else {
    }
    return
  }
  func.func @transform_0(%arg0: i32, %arg1: i32) -> (i32, i32, i32) {
    %c0_i32 = arith.constant 0 : i32
    %c0_i32_0 = arith.constant 0 : i32
    return %arg0, %arg1, %c0_i32 : i32, i32, i32
  }
  func.func @transform_1(%arg0: i32, %arg1: i32) -> (i32, i32) {
    %c0_i32 = arith.constant 0 : i32
    %c0_i32_0 = arith.constant 0 : i32
    %c0_i32_1 = arith.constant 0 : i32
    return %c0_i32, %c0_i32_0 : i32, i32
  }
  func.func @transform_2(%arg0: i32, %arg1: i32) -> (i32, i32, i32) {
    %c0_i32 = arith.constant 0 : i32
    %c0_i32_0 = arith.constant 0 : i32
    %c0_i32_1 = arith.constant 0 : i32
    return %arg0, %c0_i32, %c0_i32_0 : i32, i32, i32
  }
  func.func @transform_3(%arg0: i32, %arg1: i32) -> (i32, i32) {
    %c0_i32 = arith.constant 0 : i32
    %c0_i32_0 = arith.constant 0 : i32
    %c0_i32_1 = arith.constant 0 : i32
    return %c0_i32, %c0_i32_0 : i32, i32
  }
  func.func @transform_4(%arg0: i32, %arg1: i32) -> (i32, i32, i32) {
    %c0_i32 = arith.constant 0 : i32
    %c0_i32_0 = arith.constant 0 : i32
    %c0_i32_1 = arith.constant 0 : i32
    return %arg0, %c0_i32, %c0_i32_0 : i32, i32, i32
  }
}

</mosaic_0001>

<llo_original>
// kernel: regression_loss_attention.1
$region0: #{regression_loss_attention.1}
  #allocation0 [shape = 'u32[]', space=smem, size = 0x4, offset = 0x4, fixed_abs, tag = 'smem constant byte address 0x4 - core index']
  #allocation1 [shape = 'u32[144,128]{1,0:T(1,128)}', space=vmem, size = 0x12000, scoped, tag = 'internal scratch']
  #allocation2 [shape = 'f32[1,128]{1,0:T(1,128)}', space=vmem, size = 0x200, scoped, tag = 'scratch operand']
  #allocation3 [shape = 'f32[1,1]{1,0:T(1,128)S(6)}', space=smem, size = 0x200, scoped, tag = 'scoped memory for regression_loss_attention.1']
  %s0 = inlined_call_operand.hbm [shape: f32[2,8,128], index: 0, kind: input, shape index: {}]
  %s1 = inlined_call_operand.vmem [shape: f32[1,128], index: 1, kind: input, shape index: {}]
  %s2 = inlined_call_operand.vmem [shape: f32[2,1,1], index: 2, kind: input, shape index: {}]
  %s3 = inlined_call_operand.<no memory space> [shape: f32[1,1], index: 3, kind: input, shape index: {}]
  %s4 = inlined_call_operand.vmem [shape: f32[2,1,128], index: 4, kind: output, shape index: {}]
  %s5 = sld [smem:[#allocation0]]
  $region61: #{regression_loss_attention.1} parent=0
    _
  %s7 = ssub.s32 1, %s5
  %s8 = scalar_select 0, %s7, %s5
  %9 = sst [smem:[#allocation3]] %s3
  $region1: #{regression_loss_attention.1} parent=0
    #allocation4 [shape = 'u8[8192]{0}', space=vmem, size = 0x2000, scoped, tag = 'input window, operand 0']
    #allocation5 [shape = 's32[2]{0}', space=sflag, size = 0x8, scoped, tag = 'scoped memory for regression_loss_attention.1']
    %10 = vsyncpa [#allocation5], 0
    %s11 = scalar_lea.sflag [#allocation5], 1
    %12 = vsyncpa %s11, 0
    loop: start=0, step=1, limit=4
    $region2: #{regression_loss_attention.1} parent=1 // loop_pre_header
      _
    $region3: #{regression_loss_attention.1} parent=1 // loop_header
      %s14 = sphi 0, %s18
      %p15 = scmp.ge.s32.totalorder %s14, 4
      %s21 = sphi 0, %s33
      %s22 = sphi 0, %s29
      %s23 = sphi 0, %s21
      %s24 = sphi 0, %s22
      %s25 = sphi 0, %s23
      %s26 = sphi 0, %s24
      %s38 = sphi 0, %s40
      %s41 = sphi 0, %s38
      %s42 = sphi 0, %s41
      %s58 = sphi 0, %s42
      %s62 = sphi 0, %s62
      %s64 = sphi 0, %s62
      %s65 = sphi 0, %s64
      %s79 = sphi 0, %s65
      %s85 = sphi 0, %s87
      %s88 = sphi 0, %s85
      %s89 = sphi 0, %s88
      %s105 = sphi 0, %s89
      %s109 = sphi 0, %s109
      %s111 = sphi 0, %s109
      %s112 = sphi 0, %s111
      %s126 = sphi 0, %s112
      %s132 = sphi 0, %s134
      %s135 = sphi 0, %s132
      %s136 = sphi 0, %s135
      %s152 = sphi 0, %s136
    $region4: #{regression_loss_attention.1} parent=1 // loop_header_branch
      %17 = sbr.rel (%p15) target = $region8
    $region5: #{regression_loss_attention.1} parent=1 // loop_body
      %s19 = ssub.s32 %s14, 1
      %s20 = ssub.s32 %s14, 2
      %s27 = sadd.s32 1, %s22
      %p28 = scmp.ge.s32.totalorder %s27, 1
      %s29 = scalar_select %p28, 0, %s27
      %s30 = sadd.s32 1, %s21
      %s31 = scalar_select %p28, %s30, %s21
      %p32 = scmp.ge.s32.totalorder %s31, 2
      %s33 = scalar_select %p32, 0, %s31
      %s34 = ssub.s32 %s21, %s33
      %s35 = ssub.s32 %s22, %s29
      %s36 = sor.u32 %s34, %s35
      %p37 = scmp.eq.s32.totalorder %s36, 0
      %s39 = sadd.s32 %s38, 1
      %s40 = scalar_select %p37, %s38, %s39
      %p43 = pneg %p37
      %p44 = scmp.eq.s32.totalorder %s14, 1
      %p45 = por %p43, %p44
      %p46 = scmp.ne.s32.totalorder %s38, %s41
      %p47 = scmp.eq.s32.totalorder %s14, 0
      %p48 = por %p46, %p47
      %p49 = scmp.ne.s32.totalorder %s38, %s41
      %p50 = scmp.eq.s32.totalorder %s19, 1
      %p51 = por %p49, %p50
      %p52 = scmp.ne.s32.totalorder %s41, %s42
      %p53 = scmp.eq.s32.totalorder %s19, 0
      %p54 = por %p52, %p53
      %p55 = scmp.ne.s32.totalorder %s41, %s42
      %p56 = scmp.eq.s32.totalorder %s20, 1
      %p57 = por %p55, %p56
      %p59 = scmp.ne.s32.totalorder %s42, %s58
      %p60 = scmp.eq.s32.totalorder %s20, 0
      %p61 = por %p59, %p60
      %s63 = sadd.s32 %s62, 1
      %p66 = scmp.eq.s32.totalorder %s14, 1
      %p67 = scmp.ne.s32.totalorder %s62, %s64
      %p68 = scmp.eq.s32.totalorder %s14, 0
      %p69 = por %p67, %p68
      %p70 = scmp.ne.s32.totalorder %s62, %s64
      %p71 = scmp.eq.s32.totalorder %s19, 1
      %p72 = por %p70, %p71
      %p73 = scmp.ne.s32.totalorder %s64, %s65
      %p74 = scmp.eq.s32.totalorder %s19, 0
      %p75 = por %p73, %p74
      %p76 = scmp.ne.s32.totalorder %s64, %s65
      %p77 = scmp.eq.s32.totalorder %s20, 1
      %p78 = por %p76, %p77
      %p80 = scmp.ne.s32.totalorder %s65, %s79
      %p81 = scmp.eq.s32.totalorder %s20, 0
      %p82 = por %p80, %p81
      %s83 = ssub.s32 %s21, %s33
      %p84 = scmp.eq.s32.totalorder %s83, 0
      %s86 = sadd.s32 %s85, 1
      %s87 = scalar_select %p84, %s85, %s86
      %p90 = pneg %p84
      %p91 = scmp.eq.s32.totalorder %s14, 1
      %p92 = por %p90, %p91
      %p93 = scmp.ne.s32.totalorder %s85, %s88
      %p94 = scmp.eq.s32.totalorder %s14, 0
      %p95 = por %p93, %p94
      %p96 = scmp.ne.s32.totalorder %s85, %s88
      %p97 = scmp.eq.s32.totalorder %s19, 1
      %p98 = por %p96, %p97
      %p99 = scmp.ne.s32.totalorder %s88, %s89
      %p100 = scmp.eq.s32.totalorder %s19, 0
      %p101 = por %p99, %p100
      %p102 = scmp.ne.s32.totalorder %s88, %s89
      %p103 = scmp.eq.s32.totalorder %s20, 1
      %p104 = por %p102, %p103
      %p106 = scmp.ne.s32.totalorder %s89, %s105
      %p107 = scmp.eq.s32.totalorder %s20, 0
      %p108 = por %p106, %p107
      %s110 = sadd.s32 %s109, 1
      %p113 = scmp.eq.s32.totalorder %s14, 1
      %p114 = scmp.ne.s32.totalorder %s109, %s111
      %p115 = scmp.eq.s32.totalorder %s14, 0
      %p116 = por %p114, %p115
      %p117 = scmp.ne.s32.totalorder %s109, %s111
      %p118 = scmp.eq.s32.totalorder %s19, 1
      %p119 = por %p117, %p118
      %p120 = scmp.ne.s32.totalorder %s111, %s112
      %p121 = scmp.eq.s32.totalorder %s19, 0
      %p122 = por %p120, %p121
      %p123 = scmp.ne.s32.totalorder %s111, %s112
      %p124 = scmp.eq.s32.totalorder %s20, 1
      %p125 = por %p123, %p124
      %p127 = scmp.ne.s32.totalorder %s112, %s126
      %p128 = scmp.eq.s32.totalorder %s20, 0
      %p129 = por %p127, %p128
      %s130 = ssub.s32 %s21, %s33
      %p131 = scmp.eq.s32.totalorder %s130, 0
      %s133 = sadd.s32 %s132, 1
      %s134 = scalar_select %p131, %s132, %s133
      %p137 = pneg %p131
      %p138 = scmp.eq.s32.totalorder %s14, 1
      %p139 = por %p137, %p138
      %p140 = scmp.ne.s32.totalorder %s132, %s135
      %p141 = scmp.eq.s32.totalorder %s14, 0
      %p142 = por %p140, %p141
      %p143 = scmp.ne.s32.totalorder %s132, %s135
      %p144 = scmp.eq.s32.totalorder %s19, 1
      %p145 = por %p143, %p144
      %p146 = scmp.ne.s32.totalorder %s135, %s136
      %p147 = scmp.eq.s32.totalorder %s19, 0
      %p148 = por %p146, %p147
      %p149 = scmp.ne.s32.totalorder %s135, %s136
      %p150 = scmp.eq.s32.totalorder %s20, 1
      %p151 = por %p149, %p150
      %p153 = scmp.ne.s32.totalorder %s136, %s152
      %p154 = scmp.eq.s32.totalorder %s20, 0
      %p155 = por %p153, %p154
      %p156 = scmp.le.s32.totalorder 1, %s14
      %p157 = scmp.lt.s32.totalorder %s14, 3
      %p158 = pnand %p156, %p157
      %p159 = pneg %p158
      // Predicated region
      $region9: #{regression_loss_attention.1} parent=5 // pred_check
        _
      $region10: #{regression_loss_attention.1} parent=5 // pred_check_branch
        %161 = sbr.rel (%p158) target = $region12
      $region11: #{regression_loss_attention.1} parent=5 // pred_region
        %s162 = ssub.s32 %s14, 1
        // Predicated region
        $region13: #{regression_loss_attention.1} parent=11 // pred_check
          %p163 = pneg %p75
        $region14: #{regression_loss_attention.1} parent=11 // pred_check_branch
          %165 = sbr.rel (%p163) target = $region16
        $region15: #{regression_loss_attention.1} parent=11 // pred_region
          _
        $region16: #{regression_loss_attention.1} parent=11 // pred_fallthru
          _
        // Predicated region
        $region17: #{regression_loss_attention.1} parent=11 // pred_check
          %p166 = pneg %p122
        $region18: #{regression_loss_attention.1} parent=11 // pred_check_branch
          %168 = sbr.rel (%p166) target = $region20
        $region19: #{regression_loss_attention.1} parent=11 // pred_region
          _
        $region20: #{regression_loss_attention.1} parent=11 // pred_fallthru
          _
      $region12: #{regression_loss_attention.1} parent=5 // pred_fallthru
        _
      %p169 = scmp.lt.s32.totalorder %s14, 2
      // Predicated region
      $region21: #{regression_loss_attention.1} parent=5 // pred_check
        %p170 = pneg %p169
      $region22: #{regression_loss_attention.1} parent=5 // pred_check_branch
        %172 = sbr.rel (%p170) target = $region24
      $region23: #{regression_loss_attention.1} parent=5 // pred_region
        // Predicated region
        $region25: #{regression_loss_attention.1} parent=23 // pred_check
          %p173 = pneg %p48
        $region26: #{regression_loss_attention.1} parent=23 // pred_check_branch
          %175 = sbr.rel (%p173) target = $region28
        $region27: #{regression_loss_attention.1} parent=23 // pred_region
          %s176 = sand.u32 %s38, 1
          %s177 = scalar_lea.sflag [#allocation5], %s176
          %s178 = sand.u32 %s38, 1
          %s179 = smul.addr %s178, 8
          %s180 = scalar_lea.vmem [#allocation4], %s179
          %s182 = ssub.s32 128, 128
          %183 = vsyncadd %s177, %s182
          %s184 = sadd.s32 %s22, %s21
          %s185 = smul.addr %s184, 128
          %s186 = scalar_lea.hbm %s0, %s185
          %s188 = sshll.u32 %s180, 4
          %s189 = int_to_ptr.vmem [resolvable:$true] %s188
          %191 = dma.hbm_to_vmem [thread:$0]  %s186, 128, %s189, %s177
        $region28: #{regression_loss_attention.1} parent=23 // pred_fallthru
          _
        // Predicated region
        $region29: #{regression_loss_attention.1} parent=23 // pred_check
          %p192 = pneg %p95
        $region30: #{regression_loss_attention.1} parent=23 // pred_check_branch
          %194 = sbr.rel (%p192) target = $region32
        $region31: #{regression_loss_attention.1} parent=23 // pred_region
          %p195 = scmp.lt.s32.totalorder %s21, 1
          %s196 = scalar_select %p195, %s21, 1
          %s197 = scalar_lea.vmem %s2, %s196
        $region32: #{regression_loss_attention.1} parent=23 // pred_fallthru
          _
      $region24: #{regression_loss_attention.1} parent=5 // pred_fallthru
        _
      %p198 = scmp.le.s32.totalorder 1, %s14
      %p199 = scmp.lt.s32.totalorder %s14, 3
      %p200 = pnand %p198, %p199
      %p201 = pneg %p200
      // Predicated region
      $region33: #{regression_loss_attention.1} parent=5 // pred_check
        _
      $region34: #{regression_loss_attention.1} parent=5 // pred_check_branch
        %203 = sbr.rel (%p200) target = $region36
      $region35: #{regression_loss_attention.1} parent=5 // pred_region
        %s204 = ssub.s32 %s14, 1
        %s205 = sand.u32 %s41, 1
        %s206 = scalar_lea.sflag [#allocation5], %s205
        %s207 = sand.u32 %s41, 1
        %s208 = smul.addr %s207, 8
        %s209 = scalar_lea.vmem [#allocation4], %s208
        // Predicated region
        $region37: #{regression_loss_attention.1} parent=35 // pred_check
          %p210 = pneg %p54
        $region38: #{regression_loss_attention.1} parent=35 // pred_check_branch
          %212 = sbr.rel (%p210) target = $region40
        $region39: #{regression_loss_attention.1} parent=35 // pred_region
          %213 = dma.done %s206, 128
        $region40: #{regression_loss_attention.1} parent=35 // pred_fallthru
          _
        %s214 = sand.u32 %s41, 1
        %s215 = scalar_lea.sflag [#allocation5], %s214
        %s216 = sand.u32 %s41, 1
        %s217 = smul.addr %s216, 8
        %s218 = scalar_lea.vmem [#allocation4], %s217
        %p219 = pneg %p54
        %p220 = pneg %p51
        %p221 = pneg %p75
        %p222 = pneg %p72
        %p223 = scmp.lt.s32.totalorder %s23, 1
        %s224 = scalar_select %p223, %s23, 1
        %s225 = scalar_lea.vmem %s2, %s224
        %p226 = pneg %p101
        %p227 = pneg %p98
        %p228 = pneg %p122
        %p229 = pneg %p119
        %p230 = pneg %p148
        %p231 = pneg %p145
        %p232 = scmp.lt.s32.totalorder %s23, 1
        %s233 = scalar_select %p232, %s23, 1
        %s234 = scalar_lea.vmem %s4, %s233
        %p235 = scmp.lt.s32.totalorder %s23, 1
        %s236 = scalar_select %p235, %s23, 1
        %s237 = scalar_lea.vmem %s2, %s236
        %p238 = scmp.lt.s32.totalorder %s23, 1
        %s239 = scalar_select %p238, %s23, 1
        %s240 = scalar_lea.vmem %s4, %s239
        %p241 = scmp.eq.s32.totalorder %s24, 0
        // Predicated region
        $region41: #{regression_loss_attention.1} parent=35 // pred_check
          %p242 = pneg %p241
        $region42: #{regression_loss_attention.1} parent=35 // pred_check_branch
          %244 = sbr.rel (%p242) target = $region44
        $region43: #{regression_loss_attention.1} parent=35 // pred_region
          %245 = vst [vmem:[#allocation2] sm:$0x1] 0.0
        $region44: #{regression_loss_attention.1} parent=35 // pred_fallthru
          _
        %v246 = vld [vmem:[%s209] sm:$0xff]
        %v247 = vld [vmem:[#allocation2] sm:$0x1]
        %v248 = vrot.slane %v246, 4
        %v249 = vadd.f32 %v246, %v248
        %v250 = vrot.slane %v249, 2
        %v251 = vadd.f32 %v249, %v250
        %v252 = vrot.slane %v251, 1
        %v253 = vadd.f32 %v251, %v252
        %v254 = vadd.f32 %v247, %v253
        %255 = vst [vmem:[#allocation2] sm:$0x1] %v254
        // Predicated region
        $region45: #{regression_loss_attention.1} parent=35 // pred_check
          %p256 = pneg %p241
        $region46: #{regression_loss_attention.1} parent=35 // pred_check_branch
          %258 = sbr.rel (%p256) target = $region48
        $region47: #{regression_loss_attention.1} parent=35 // pred_region
          %v259 = vld [vmem:[#allocation2] sm:$0x1]
          %v260 = vmul.f32 %v259, 0.125
          %v261 = vld [vmem:[%s1] sm:$0x1]
          %s262 = sld [smem:[#allocation3]]
          %v263 = vmul.f32 %v260, %v261
          %vm264 = vcmask 1040384
          %v265 = vsel %vm264, %v263, 0.0
          %266 = vadd.xlane.f32.xlu0 %v265
          %v267 = vpop.xlane.xlu0 %266
          %v268 = vstv %s262
          %v269 = vadd.f32 %v267, %v268
          %v270 = vtanh.pop %v269
          %v271 = vsub.f32 %v270, %v270
          %v272 = vmul.f32 %v271, 1.442695
          %v273 = vpow.pop %v272
          %v274 = vadd.f32 %v273, 0.0
          %v275 = vrcp.pop %v274
          %v276 = vmul.f32 %v273, %v275
          %v277 = vmul.f32 %v260, %v276
          %v278 = vsel %vm264, %v277, 0.0
          %279 = vadd.xlane.f32.xlu0 %v278
          %v280 = vpop.xlane.xlu0 %279
          %v281 = vld [vmem:[%s237] sm:$0x1]
          %v282 = vsub.f32 %v280, %v281
          %v283 = vmul.f32 %v282, %v282
          %v284 = vand.u32 2147483647, %v283
          %v285 = vadd.f32 %v284, 0.0
          %s286 = vtos %v285
          %v287 = vstv %s286
          %288 = vst [vmem:[%s240] sm:$0x1] %v287
        $region48: #{regression_loss_attention.1} parent=35 // pred_fallthru
          _
        %p289 = scmp.lt.s32.totalorder %s23, 1
        %s290 = scalar_select %p289, %s23, 1
        %s291 = scalar_lea.vmem %s4, %s290
        // Predicated region
        $region49: #{regression_loss_attention.1} parent=35 // pred_check
          %p292 = pneg %p145
        $region50: #{regression_loss_attention.1} parent=35 // pred_check_branch
          %294 = sbr.rel (%p292) target = $region52
        $region51: #{regression_loss_attention.1} parent=35 // pred_region
          _
        $region52: #{regression_loss_attention.1} parent=35 // pred_fallthru
          _
      $region36: #{regression_loss_attention.1} parent=5 // pred_fallthru
        _
      %p295 = scmp.le.s32.totalorder 2, %s14
      // Predicated region
      $region53: #{regression_loss_attention.1} parent=5 // pred_check
        %p296 = pneg %p295
      $region54: #{regression_loss_attention.1} parent=5 // pred_check_branch
        %298 = sbr.rel (%p296) target = $region56
      $region55: #{regression_loss_attention.1} parent=5 // pred_region
        %s299 = ssub.s32 %s14, 2
        // Predicated region
        $region57: #{regression_loss_attention.1} parent=55 // pred_check
          %p300 = pneg %p151
        $region58: #{regression_loss_attention.1} parent=55 // pred_check_branch
          %302 = sbr.rel (%p300) target = $region60
        $region59: #{regression_loss_attention.1} parent=55 // pred_region
          %p303 = scmp.lt.s32.totalorder %s25, 1
          %s304 = scalar_select %p303, %s25, 1
          %s305 = scalar_lea.vmem %s4, %s304
        $region60: #{regression_loss_attention.1} parent=55 // pred_fallthru
          _
      $region56: #{regression_loss_attention.1} parent=5 // pred_fallthru
        _
    $region6: #{regression_loss_attention.1} parent=1 // loop_footer
      %s18 = sadd.s32 1, %s14
    $region7: #{regression_loss_attention.1} parent=1 // loop_footer_branch
      %13 = sbr.rel target = $region3
    $region8: #{regression_loss_attention.1} parent=1 // loop_exit
      _
    %306 = vsyncpa [#allocation5], 1
    %s307 = scalar_lea.sflag [#allocation5], 1
    %308 = vsyncpa %s307, 1

</llo_original>
